<compile_context>
chip_gen: v7x
topology: tpu7x:2x2x1
jax: 0.10.0
libtpu: 0.0.40
codegen_flags: <defaults>
</compile_context>

<pallas_src>
import functools

import jax
import jax.numpy as jnp
import numpy as np
from jax.experimental import pallas as pl
from jax.experimental.pallas import tpu as pltpu

LANE = 128  # TPU lane width; all layer output dims are padded to this.


# ----------------------------- Pallas kernel -------------------------------
def dqn_mlp_kernel(x_ref, w1_ref, w_ref, b_ref, o_ref):
    """Fused 4-layer MLP on one (TB, LANE)-dense batch tile.

    x_ref : (TB, input_dims)   f32
    w1_ref: (input_dims, LANE) f32   (fc1 weight, transposed + lane-padded)
    w_ref : (3, LANE, LANE)    f32   (fc2, fc3, fc4 weights, transposed + padded)
    b_ref : (4, LANE)          f32   (fc1..fc4 biases, lane-padded)
    o_ref : (TB, LANE)         f32   (padded Q-values; real ones in [:, :n_actions])
    """
    x = x_ref[...]
    b = b_ref[...]

    # fc1 + ReLU  (K = input_dims, N = LANE)
    h = jnp.dot(x, w1_ref[...], preferred_element_type=jnp.float32) + b[0:1, :]
    h = jnp.maximum(h, 0.0)

    # fc2 + ReLU
    h = jnp.dot(h, w_ref[0], preferred_element_type=jnp.float32) + b[1:2, :]
    h = jnp.maximum(h, 0.0)

    # fc3 + ReLU
    h = jnp.dot(h, w_ref[1], preferred_element_type=jnp.float32) + b[2:3, :]
    h = jnp.maximum(h, 0.0)

    # fc4 (no activation) -> padded Q-values, full-lane unmasked store
    o_ref[...] = jnp.dot(h, w_ref[2], preferred_element_type=jnp.float32) + b[3:4, :]


# ------------------------------ wrapper -------------------------------------
def _round_up(x, m):
    return ((x + m - 1) // m) * m


def dqn_forward_pallas(state, packed, *, batch_tile=256):
    """state: (B, input_dims) f32.  packed: output of pack_params()."""
    B, input_dims = state.shape
    n_actions = packed["n_actions"]

    # Pick a batch tile (multiple of 8 sublanes) and pad B up to a multiple of it,
    # so the kernel only ever sees full, aligned tiles.
    tb = min(batch_tile, _round_up(B, 8))
    tb = _round_up(tb, 8)
    Bp = _round_up(B, tb)
    if Bp != B:
        state = jnp.pad(state, ((0, Bp - B), (0, 0)))

    grid = (Bp // tb,)

    out_padded = pl.pallas_call(
        dqn_mlp_kernel,
        out_shape=jax.ShapeDtypeStruct((Bp, LANE), jnp.float32),
        grid=grid,
        in_specs=[
            # batch-tiled activations
            pl.BlockSpec((tb, input_dims), lambda i: (i, 0)),
            # weights / biases: constant block index -> stay resident across steps
            pl.BlockSpec((input_dims, LANE), lambda i: (0, 0)),
            pl.BlockSpec((3, LANE, LANE), lambda i: (0, 0, 0)),
            pl.BlockSpec((4, LANE), lambda i: (0, 0)),
        ],
        out_specs=pl.BlockSpec((tb, LANE), lambda i: (i, 0)),
        compiler_params=pltpu.CompilerParams(
            dimension_semantics=("parallel",),
        ),
    )(state, packed["w1"], packed["w_stack"], packed["b_stack"])

    # Undo batch padding and lane padding of the action dimension.
    return out_padded[:B, :n_actions]


# ------------------------- deterministic param init ------------------------
def _linear_init(key, fan_in, fan_out):
    """Mimics nn.Linear default init: U(-1/sqrt(fan_in), 1/sqrt(fan_in)).
    Stored in PyTorch layout: W (fan_out, fan_in), b (fan_out,)."""
    kw, kb = jax.random.split(key)
    bound = 1.0 / np.sqrt(fan_in)
    w = jax.random.uniform(kw, (fan_out, fan_in), jnp.float32, -bound, bound)
    b = jax.random.uniform(kb, (fan_out,), jnp.float32, -bound, bound)
    return w, b


def make_params(key, input_dims, fc1_dims, fc2_dims, n_actions):
    k1, k2, k3, k4 = jax.random.split(key, 4)
    w1, b1 = _linear_init(k1, input_dims, fc1_dims)
    w2, b2 = _linear_init(k2, fc1_dims, fc2_dims)
    w3, b3 = _linear_init(k3, fc2_dims, fc2_dims)
    w4, b4 = _linear_init(k4, fc2_dims, n_actions)
    return dict(w1=w1, b1=b1, w2=w2, b2=b2, w3=w3, b3=b3, w4=w4, b4=b4)


def pack_params(p, input_dims, fc1_dims, fc2_dims, n_actions):
    """Transpose weights to (in, out), zero-pad every output dim to LANE lanes,
    and stack fc2/fc3/fc4 weights and all biases so the kernel takes 4 inputs."""
    assert max(fc1_dims, fc2_dims, n_actions) <= LANE, "hidden dims must be <= 128"

    w1 = jnp.pad(p["w1"].T, ((0, 0), (0, LANE - fc1_dims)))                    # (in, LANE)
    w2 = jnp.pad(p["w2"].T, ((0, LANE - fc1_dims), (0, LANE - fc2_dims)))      # (LANE, LANE)
    w3 = jnp.pad(p["w3"].T, ((0, LANE - fc2_dims), (0, LANE - fc2_dims)))      # (LANE, LANE)
    w4 = jnp.pad(p["w4"].T, ((0, LANE - fc2_dims), (0, LANE - n_actions)))     # (LANE, LANE)
    w_stack = jnp.stack([w2, w3, w4])                                          # (3, LANE, LANE)

    b_stack = jnp.stack([
        jnp.pad(p["b1"], (0, LANE - fc1_dims)),
        jnp.pad(p["b2"], (0, LANE - fc2_dims)),
        jnp.pad(p["b3"], (0, LANE - fc2_dims)),
        jnp.pad(p["b4"], (0, LANE - n_actions)),
    ])                                                                         # (4, LANE)

    return dict(w1=w1, w_stack=w_stack, b_stack=b_stack, n_actions=n_actions)


# ------------------------------- reference ---------------------------------
def dqn_forward_ref(state, p):
    h = jax.nn.relu(state @ p["w1"].T + p["b1"])
    h = jax.nn.relu(h @ p["w2"].T + p["b2"])
    h = jax.nn.relu(h @ p["w3"].T + p["b3"])
    return h @ p["w4"].T + p["b4"]


# --------------------------------- main -------------------------------------
if __name__ == "__main__":
    # Shapes consistent with DeepQNetworkLinear(lr, input_dims=(16,),
    # fc1_dims=64, fc2_dims=32, n_actions=8). B=37 deliberately exercises the
    # batch-tiling + padding path (batch_tile=16 -> grid=(3,), padded B=48).
    B, INPUT_DIMS, FC1, FC2, N_ACTIONS = 37, 16, 64, 32, 8

    key = jax.random.PRNGKey(0)
    k_state, k_params = jax.random.split(key)

    state = jax.random.normal(k_state, (B, INPUT_DIMS), dtype=jnp.float32)
    params = make_params(k_params, INPUT_DIMS, FC1, FC2, N_ACTIONS)
    packed = pack_params(params, INPUT_DIMS, FC1, FC2, N_ACTIONS)

    actions = dqn_forward_pallas(state, packed, batch_tile=16)
    jax.block_until_ready(actions)

    # Sanity check against pure-JAX reference (PyTorch-layout params).
    expected = dqn_forward_ref(state, params)
    np.testing.assert_allclose(np.asarray(actions), np.asarray(expected),
                               rtol=1e-5, atol=1e-5)

    print("KERNEL_OK")
</pallas_src>

<mosaic_0001>
module attributes {stable_mosaic.version = 11 : i64} {
  func.func @dqn_mlp_kernel(%arg0: i32, %arg1: memref<16x16xf32, #tpu.memory_space<vmem>>, %arg2: memref<16x128xf32, #tpu.memory_space<vmem>>, %arg3: memref<3x128x128xf32, #tpu.memory_space<vmem>>, %arg4: memref<4x128xf32, #tpu.memory_space<vmem>>, %arg5: memref<16x128xf32, #tpu.memory_space<vmem>>) attributes {dimension_semantics = [#tpu.dimension_semantics<parallel>], iteration_bounds = array<i64: 3>, scalar_prefetch = 0 : i64, scratch_operands = 0 : i64, tpu.core_type = #tpu.core_type<tc>, window_params = [{transform_indices = @transform_0, window_bounds = array<i64: 16, 16>}, {pipeline_mode = #tpu.pipeline_mode<synchronous>, transform_indices = @transform_1, window_bounds = array<i64: 16, 128>}, {pipeline_mode = #tpu.pipeline_mode<synchronous>, transform_indices = @transform_2, window_bounds = array<i64: 3, 128, 128>}, {pipeline_mode = #tpu.pipeline_mode<synchronous>, transform_indices = @transform_3, window_bounds = array<i64: 4, 128>}, {transform_indices = @transform_4, window_bounds = array<i64: 16, 128>}]} {
    %c0 = arith.constant 0 : index
    %c0_0 = arith.constant 0 : index
    %0 = vector.load %arg1[%c0, %c0_0] : memref<16x16xf32, #tpu.memory_space<vmem>>, vector<16x16xf32>
    %c0_1 = arith.constant 0 : index
    %c0_2 = arith.constant 0 : index
    %1 = vector.load %arg4[%c0_1, %c0_2] : memref<4x128xf32, #tpu.memory_space<vmem>>, vector<4x128xf32>
    %c0_3 = arith.constant 0 : index
    %c0_4 = arith.constant 0 : index
    %2 = vector.load %arg2[%c0_3, %c0_4] : memref<16x128xf32, #tpu.memory_space<vmem>>, vector<16x128xf32>
    %cst = arith.constant dense<0.000000e+00> : vector<16x128xf32>
    %3 = tpu.matmul %0, %2, %cst {dimension_numbers = #tpu.dot_dimension_numbers<[1], [0], [0], [1], [0, 0, 1, 1], [], []>} : vector<16x16xf32>, vector<16x128xf32>, vector<16x128xf32> -> vector<16x128xf32>
    %4 = vector.extract_strided_slice %1 {offsets = [0, 0], sizes = [1, 128], strides = [1, 1]} : vector<4x128xf32> to vector<1x128xf32>
    %5 = vector.broadcast %4 : vector<1x128xf32> to vector<16x128xf32>
    %6 = arith.addf %3, %5 : vector<16x128xf32>
    %cst_5 = arith.constant 0.000000e+00 : f32
    %7 = vector.broadcast %cst_5 : f32 to vector<16x128xf32>
    %8 = arith.maximumf %6, %7 : vector<16x128xf32>
    %c0_6 = arith.constant 0 : index
    %c0_7 = arith.constant 0 : index
    %c0_8 = arith.constant 0 : index
    %9 = vector.load %arg3[%c0_6, %c0_7, %c0_8] : memref<3x128x128xf32, #tpu.memory_space<vmem>>, vector<1x128x128xf32>
    %10 = vector.shape_cast %9 : vector<1x128x128xf32> to vector<128x128xf32>
    %cst_9 = arith.constant dense<0.000000e+00> : vector<16x128xf32>
    %11 = tpu.matmul %8, %10, %cst_9 {dimension_numbers = #tpu.dot_dimension_numbers<[1], [0], [0], [1], [0, 0, 1, 1], [], []>} : vector<16x128xf32>, vector<128x128xf32>, vector<16x128xf32> -> vector<16x128xf32>
    %12 = vector.extract_strided_slice %1 {offsets = [1, 0], sizes = [1, 128], strides = [1, 1]} : vector<4x128xf32> to vector<1x128xf32>
    %13 = vector.broadcast %12 : vector<1x128xf32> to vector<16x128xf32>
    %14 = arith.addf %11, %13 : vector<16x128xf32>
    %cst_10 = arith.constant 0.000000e+00 : f32
    %15 = vector.broadcast %cst_10 : f32 to vector<16x128xf32>
    %16 = arith.maximumf %14, %15 : vector<16x128xf32>
    %c1 = arith.constant 1 : index
    %c0_11 = arith.constant 0 : index
    %c0_12 = arith.constant 0 : index
    %17 = vector.load %arg3[%c1, %c0_11, %c0_12] : memref<3x128x128xf32, #tpu.memory_space<vmem>>, vector<1x128x128xf32>
    %18 = vector.shape_cast %17 : vector<1x128x128xf32> to vector<128x128xf32>
    %cst_13 = arith.constant dense<0.000000e+00> : vector<16x128xf32>
    %19 = tpu.matmul %16, %18, %cst_13 {dimension_numbers = #tpu.dot_dimension_numbers<[1], [0], [0], [1], [0, 0, 1, 1], [], []>} : vector<16x128xf32>, vector<128x128xf32>, vector<16x128xf32> -> vector<16x128xf32>
    %20 = vector.extract_strided_slice %1 {offsets = [2, 0], sizes = [1, 128], strides = [1, 1]} : vector<4x128xf32> to vector<1x128xf32>
    %21 = vector.broadcast %20 : vector<1x128xf32> to vector<16x128xf32>
    %22 = arith.addf %19, %21 : vector<16x128xf32>
    %cst_14 = arith.constant 0.000000e+00 : f32
    %23 = vector.broadcast %cst_14 : f32 to vector<16x128xf32>
    %24 = arith.maximumf %22, %23 : vector<16x128xf32>
    %c2 = arith.constant 2 : index
    %c0_15 = arith.constant 0 : index
    %c0_16 = arith.constant 0 : index
    %25 = vector.load %arg3[%c2, %c0_15, %c0_16] : memref<3x128x128xf32, #tpu.memory_space<vmem>>, vector<1x128x128xf32>
    %26 = vector.shape_cast %25 : vector<1x128x128xf32> to vector<128x128xf32>
    %cst_17 = arith.constant dense<0.000000e+00> : vector<16x128xf32>
    %27 = tpu.matmul %24, %26, %cst_17 {dimension_numbers = #tpu.dot_dimension_numbers<[1], [0], [0], [1], [0, 0, 1, 1], [], []>} : vector<16x128xf32>, vector<128x128xf32>, vector<16x128xf32> -> vector<16x128xf32>
    %28 = vector.extract_strided_slice %1 {offsets = [3, 0], sizes = [1, 128], strides = [1, 1]} : vector<4x128xf32> to vector<1x128xf32>
    %29 = vector.broadcast %28 : vector<1x128xf32> to vector<16x128xf32>
    %30 = arith.addf %27, %29 : vector<16x128xf32>
    %c0_18 = arith.constant 0 : index
    %c0_19 = arith.constant 0 : index
    %31 = vector.load %arg5[%c0_18, %c0_19] : memref<16x128xf32, #tpu.memory_space<vmem>>, vector<16x128xf32>
    tpu.vector_store %arg5[%c0_18, %c0_19], %30 {strides = array<i32>} : memref<16x128xf32, #tpu.memory_space<vmem>>, vector<16x128xf32>,
    return
  }
  func.func @transform_0(%arg0: i32) -> (i32, i32) {
    %c0_i32 = arith.constant 0 : i32
    %c0_i32_0 = arith.constant 0 : i32
    return %arg0, %c0_i32 : i32, i32
  }
  func.func @transform_1(%arg0: i32) -> (i32, i32) {
    %c0_i32 = arith.constant 0 : i32
    %c0_i32_0 = arith.constant 0 : i32
    %c0_i32_1 = arith.constant 0 : i32
    return %c0_i32, %c0_i32_0 : i32, i32
  }
  func.func @transform_2(%arg0: i32) -> (i32, i32, i32) {
    %c0_i32 = arith.constant 0 : i32
    %c0_i32_0 = arith.constant 0 : i32
    %c0_i32_1 = arith.constant 0 : i32
    %c0_i32_2 = arith.constant 0 : i32
    return %c0_i32, %c0_i32_0, %c0_i32_1 : i32, i32, i32
  }
  func.func @transform_3(%arg0: i32) -> (i32, i32) {
    %c0_i32 = arith.constant 0 : i32
    %c0_i32_0 = arith.constant 0 : i32
    %c0_i32_1 = arith.constant 0 : i32
    return %c0_i32, %c0_i32_0 : i32, i32
  }
  func.func @transform_4(%arg0: i32) -> (i32, i32) {
    %c0_i32 = arith.constant 0 : i32
    %c0_i32_0 = arith.constant 0 : i32
    return %arg0, %c0_i32 : i32, i32
  }
}

</mosaic_0001>

<llo_original>
// kernel: tpu_custom_call.1
$region0: #{tpu_custom_call.1}
  #allocation0 [shape = 'u32[]', space=smem, size = 0x4, offset = 0x4, fixed_abs, tag = 'smem constant byte address 0x4 - core index']
  #allocation1 [shape = 'u32[144,128]{1,0:T(1,128)}', space=vmem, size = 0x12000, scoped, tag = 'internal scratch']
  %s0 = inlined_call_operand.vmem [shape: f32[48,16], index: 0, kind: input, shape index: {}]
  %s1 = inlined_call_operand.vmem [shape: f32[16,128], index: 1, kind: input, shape index: {}]
  %s2 = inlined_call_operand.hbm [shape: f32[3,128,128], index: 2, kind: input, shape index: {}]
  %s3 = inlined_call_operand.vmem [shape: f32[4,128], index: 3, kind: input, shape index: {}]
  %s4 = inlined_call_operand.hbm [shape: f32[48,128], index: 4, kind: output, shape index: {}]
  %s5 = sld [smem:[#allocation0]]
  $region53: #{tpu_custom_call.1} parent=0
    _
  %s7 = ssub.s32 1, %s5
  %s8 = scalar_select 0, %s7, %s5
  $region1: #{tpu_custom_call.1} parent=0
    #allocation2 [shape = 'u8[196608]{0}', space=vmem, size = 0x30000, scoped, tag = 'input window, operand 2, single buffered']
    #allocation3 [shape = 's32[2]{0}', space=sflag, size = 0x8, scoped, tag = 'scoped memory for tpu_custom_call.1']
    #allocation4 [shape = 's32[2]{0}', space=sflag, size = 0x8, scoped, tag = 'scoped memory for tpu_custom_call.1']
    #allocation5 [shape = 'u8[16384]{0}', space=vmem, size = 0x4000, scoped, tag = 'output window, operand 0']
    %9 = vsyncpa [#allocation3], 0
    %10 = vsyncpa [#allocation4], 0
    %s11 = scalar_lea.sflag [#allocation4], 1
    %12 = vsyncpa %s11, 0
    loop: start=0, step=1, limit=5
    $region2: #{tpu_custom_call.1} parent=1 // loop_pre_header
      _
    $region3: #{tpu_custom_call.1} parent=1 // loop_header
      %s14 = sphi 0, %s18
      %p15 = scmp.ge.s32.totalorder %s14, 5
      %s24 = sphi 0, %s26
      %s27 = sphi 0, %s24
      %s28 = sphi 0, %s27
      %s44 = sphi 0, %s28
      %s48 = sphi 0, %s48
      %s50 = sphi 0, %s48
      %s51 = sphi 0, %s50
      %s65 = sphi 0, %s51
      %s69 = sphi 0, %s69
      %s71 = sphi 0, %s69
      %s72 = sphi 0, %s71
      %s86 = sphi 0, %s72
      %s90 = sphi 0, %s90
      %s92 = sphi 0, %s90
      %s93 = sphi 0, %s92
      %s107 = sphi 0, %s93
      %s113 = sphi 0, %s115
      %s116 = sphi 0, %s113
      %s117 = sphi 0, %s116
      %s133 = sphi 0, %s117
    $region4: #{tpu_custom_call.1} parent=1 // loop_header_branch
      %17 = sbr.rel (%p15) target = $region8
    $region5: #{tpu_custom_call.1} parent=1 // loop_body
      %s19 = ssub.s32 %s14, 1
      %s20 = ssub.s32 %s14, 2
      %s21 = sadd.s32 %s14, 1
      %s22 = ssub.s32 %s14, %s21
      %p23 = scmp.eq.s32.totalorder %s22, 0
      %s25 = sadd.s32 %s24, 1
      %s26 = scalar_select %p23, %s24, %s25
      %p29 = pneg %p23
      %p30 = scmp.eq.s32.totalorder %s14, 2
      %p31 = por %p29, %p30
      %p32 = scmp.ne.s32.totalorder %s24, %s27
      %p33 = scmp.eq.s32.totalorder %s14, 0
      %p34 = por %p32, %p33
      %p35 = scmp.ne.s32.totalorder %s24, %s27
      %p36 = scmp.eq.s32.totalorder %s19, 2
      %p37 = por %p35, %p36
      %p38 = scmp.ne.s32.totalorder %s27, %s28
      %p39 = scmp.eq.s32.totalorder %s19, 0
      %p40 = por %p38, %p39
      %p41 = scmp.ne.s32.totalorder %s27, %s28
      %p42 = scmp.eq.s32.totalorder %s20, 2
      %p43 = por %p41, %p42
      %p45 = scmp.ne.s32.totalorder %s28, %s44
      %p46 = scmp.eq.s32.totalorder %s20, 0
      %p47 = por %p45, %p46
      %s49 = sadd.s32 %s48, 1
      %p52 = scmp.eq.s32.totalorder %s14, 2
      %p53 = scmp.ne.s32.totalorder %s48, %s50
      %p54 = scmp.eq.s32.totalorder %s14, 0
      %p55 = por %p53, %p54
      %p56 = scmp.ne.s32.totalorder %s48, %s50
      %p57 = scmp.eq.s32.totalorder %s19, 2
      %p58 = por %p56, %p57
      %p59 = scmp.ne.s32.totalorder %s50, %s51
      %p60 = scmp.eq.s32.totalorder %s19, 0
      %p61 = por %p59, %p60
      %p62 = scmp.ne.s32.totalorder %s50, %s51
      %p63 = scmp.eq.s32.totalorder %s20, 2
      %p64 = por %p62, %p63
      %p66 = scmp.ne.s32.totalorder %s51, %s65
      %p67 = scmp.eq.s32.totalorder %s20, 0
      %p68 = por %p66, %p67
      %s70 = sadd.s32 %s69, 1
      %p73 = scmp.eq.s32.totalorder %s14, 2
      %p74 = scmp.ne.s32.totalorder %s69, %s71
      %p75 = scmp.eq.s32.totalorder %s14, 0
      %p76 = por %p74, %p75
      %p77 = scmp.ne.s32.totalorder %s69, %s71
      %p78 = scmp.eq.s32.totalorder %s19, 2
      %p79 = por %p77, %p78
      %p80 = scmp.ne.s32.totalorder %s71, %s72
      %p81 = scmp.eq.s32.totalorder %s19, 0
      %p82 = por %p80, %p81
      %p83 = scmp.ne.s32.totalorder %s71, %s72
      %p84 = scmp.eq.s32.totalorder %s20, 2
      %p85 = por %p83, %p84
      %p87 = scmp.ne.s32.totalorder %s72, %s86
      %p88 = scmp.eq.s32.totalorder %s20, 0
      %p89 = por %p87, %p88
      %s91 = sadd.s32 %s90, 1
      %p94 = scmp.eq.s32.totalorder %s14, 2
      %p95 = scmp.ne.s32.totalorder %s90, %s92
      %p96 = scmp.eq.s32.totalorder %s14, 0
      %p97 = por %p95, %p96
      %p98 = scmp.ne.s32.totalorder %s90, %s92
      %p99 = scmp.eq.s32.totalorder %s19, 2
      %p100 = por %p98, %p99
      %p101 = scmp.ne.s32.totalorder %s92, %s93
      %p102 = scmp.eq.s32.totalorder %s19, 0
      %p103 = por %p101, %p102
      %p104 = scmp.ne.s32.totalorder %s92, %s93
      %p105 = scmp.eq.s32.totalorder %s20, 2
      %p106 = por %p104, %p105
      %p108 = scmp.ne.s32.totalorder %s93, %s107
      %p109 = scmp.eq.s32.totalorder %s20, 0
      %p110 = por %p108, %p109
      %s111 = ssub.s32 %s14, %s21
      %p112 = scmp.eq.s32.totalorder %s111, 0
      %s114 = sadd.s32 %s113, 1
      %s115 = scalar_select %p112, %s113, %s114
      %p118 = pneg %p112
      %p119 = scmp.eq.s32.totalorder %s14, 2
      %p120 = por %p118, %p119
      %p121 = scmp.ne.s32.totalorder %s113, %s116
      %p122 = scmp.eq.s32.totalorder %s14, 0
      %p123 = por %p121, %p122
      %p124 = scmp.ne.s32.totalorder %s113, %s116
      %p125 = scmp.eq.s32.totalorder %s19, 2
      %p126 = por %p124, %p125
      %p127 = scmp.ne.s32.totalorder %s116, %s117
      %p128 = scmp.eq.s32.totalorder %s19, 0
      %p129 = por %p127, %p128
      %p130 = scmp.ne.s32.totalorder %s116, %s117
      %p131 = scmp.eq.s32.totalorder %s20, 2
      %p132 = por %p130, %p131
      %p134 = scmp.ne.s32.totalorder %s117, %s133
      %p135 = scmp.eq.s32.totalorder %s20, 0
      %p136 = por %p134, %p135
      %p137 = scmp.le.s32.totalorder 1, %s14
      %p138 = scmp.lt.s32.totalorder %s14, 4
      %p139 = pnand %p137, %p138
      %p140 = pneg %p139
      // Predicated region
      $region9: #{tpu_custom_call.1} parent=5 // pred_check
        _
      $region10: #{tpu_custom_call.1} parent=5 // pred_check_branch
        %142 = sbr.rel (%p139) target = $region12
      $region11: #{tpu_custom_call.1} parent=5 // pred_region
        %s143 = ssub.s32 %s14, 1
        // Predicated region
        $region13: #{tpu_custom_call.1} parent=11 // pred_check
          %p144 = pneg %p61
        $region14: #{tpu_custom_call.1} parent=11 // pred_check_branch
          %146 = sbr.rel (%p144) target = $region16
        $region15: #{tpu_custom_call.1} parent=11 // pred_region
          _
        $region16: #{tpu_custom_call.1} parent=11 // pred_fallthru
          _
        // Predicated region
        $region17: #{tpu_custom_call.1} parent=11 // pred_check
          %p147 = pneg %p82
        $region18: #{tpu_custom_call.1} parent=11 // pred_check_branch
          %149 = sbr.rel (%p147) target = $region20
        $region19: #{tpu_custom_call.1} parent=11 // pred_region
          %s151 = ssub.s32 6144, 6144
          %152 = vsyncadd [#allocation3], %s151
          %s153 = sshll.u32 [#allocation2], 4
          %s154 = int_to_ptr.vmem [resolvable:$true] %s153
          %159 = dma.hbm_to_vmem [thread:$0]  %s2, 6144, %s154, [#allocation3], 128, 128, 8
        $region20: #{tpu_custom_call.1} parent=11 // pred_fallthru
          _
        // Predicated region
        $region21: #{tpu_custom_call.1} parent=11 // pred_check
          %p160 = pneg %p103
        $region22: #{tpu_custom_call.1} parent=11 // pred_check_branch
          %162 = sbr.rel (%p160) target = $region24
        $region23: #{tpu_custom_call.1} parent=11 // pred_region
          _
        $region24: #{tpu_custom_call.1} parent=11 // pred_fallthru
          _
      $region12: #{tpu_custom_call.1} parent=5 // pred_fallthru
        _
      %p163 = scmp.lt.s32.totalorder %s14, 3
      // Predicated region
      $region25: #{tpu_custom_call.1} parent=5 // pred_check
        %p164 = pneg %p163
      $region26: #{tpu_custom_call.1} parent=5 // pred_check_branch
        %166 = sbr.rel (%p164) target = $region28
      $region27: #{tpu_custom_call.1} parent=5 // pred_region
        // Predicated region
        $region29: #{tpu_custom_call.1} parent=27 // pred_check
          %p167 = pneg %p34
        $region30: #{tpu_custom_call.1} parent=27 // pred_check_branch
          %169 = sbr.rel (%p167) target = $region32
        $region31: #{tpu_custom_call.1} parent=27 // pred_region
          %s170 = smul.u32 2, %s14
          %p171 = scmp.lt.s32.totalorder %s170, 5
          %s172 = scalar_select %p171, %s170, 5
          %s173 = smul.addr %s172, 8
          %s174 = scalar_lea.vmem %s0, %s173
          %s175 = smul.u32 2, %s14
        $region32: #{tpu_custom_call.1} parent=27 // pred_fallthru
          _
      $region28: #{tpu_custom_call.1} parent=5 // pred_fallthru
        _
      %p176 = scmp.le.s32.totalorder 1, %s14
      %p177 = scmp.lt.s32.totalorder %s14, 4
      %p178 = pnand %p176, %p177
      %p179 = pneg %p178
      // Predicated region
      $region33: #{tpu_custom_call.1} parent=5 // pred_check
        _
      $region34: #{tpu_custom_call.1} parent=5 // pred_check_branch
        %181 = sbr.rel (%p178) target = $region36
      $region35: #{tpu_custom_call.1} parent=5 // pred_region
        %s182 = ssub.s32 %s14, 1
        // Predicated region
        $region37: #{tpu_custom_call.1} parent=35 // pred_check
          %p183 = pneg %p82
        $region38: #{tpu_custom_call.1} parent=35 // pred_check_branch
          %185 = sbr.rel (%p183) target = $region40
        $region39: #{tpu_custom_call.1} parent=35 // pred_region
          %186 = dma.done [#allocation3], 6144
        $region40: #{tpu_custom_call.1} parent=35 // pred_fallthru
          _
        %s187 = smul.u32 2, %s19
        %p188 = scmp.lt.s32.totalorder %s187, 5
        %s189 = scalar_select %p188, %s187, 5
        %s190 = smul.addr %s189, 8
        %s191 = scalar_lea.vmem %s0, %s190
        %p192 = pneg %p40
        %p193 = pneg %p37
        %p194 = pneg %p61
        %p195 = pneg %p58
        %p196 = pneg %p82
        %p197 = pneg %p79
        %p198 = pneg %p103
        %p199 = pneg %p100
        %p200 = pneg %p129
        %p201 = pneg %p126
        %s202 = sand.u32 %s116, 1
        %s203 = scalar_lea.sflag [#allocation4], %s202
        %s204 = sand.u32 %s116, 1
        %s205 = smul.addr %s204, 16
        %s206 = scalar_lea.vmem [#allocation5], %s205
        %s207 = smul.u32 2, %s19
        %p208 = scmp.lt.s32.totalorder %s207, 5
        %s209 = scalar_select %p208, %s207, 5
        %s210 = smul.addr %s209, 8
        %s211 = scalar_lea.vmem %s0, %s210
        %s212 = smul.u32 2, %s19
        %s213 = smul.u32 2, %s19
        %v214 = vld [vmem:[%s211] sm:$0xff]
        %v215 = vld [vmem:[%s211 + $0x8] sm:$0xff]
        %v216 = vld [vmem:[%s3] sm:$0xf]
        %v217 = vld [vmem:[%s1] sm:$0xff]
        %v218 = vld [vmem:[%s1 + $0x8] sm:$0xff]
        %v219 = vlaneseq
        %v220 = vshrl.u32 %v219, 7
        %v221 = vsub.s32 0, %v220
        %v222 = vrot.slane %v216, %v221
        %vm223 = vcmask 130048
        %v225 = vsel %vm223, %v214, 0
        %v228 = vsel %vm223, %v215, 0
        %230 = vmatprep.subr.mxu0 0.0
        %231 = vmatpush1.msra.mxu0 %v217
        %232 = vmatprep.subr.mxu0 0.0
        %233 = vmatpush1.msra.mxu0 %v218
        %234 = vmatprep.subr.mxu0 0.0
        %235 = vmatpush1.msra.mxu0 0.0
        %236 = vmatprep.subr.mxu0 0.0
        %237 = vmatpush1.msra.mxu0 0.0
        %238 = vmatprep.subr.mxu0 0.0
        %239 = vmatpush1.msra.mxu0 0.0
        %240 = vmatprep.subr.mxu0 0.0
        %241 = vmatpush1.msra.mxu0 0.0
        %242 = vmatprep.subr.mxu0 0.0
        %243 = vmatpush1.msra.mxu0 0.0
        %244 = vmatprep.subr.mxu0 0.0
        %245 = vmatpush1.msra.mxu0 0.0
        %246 = vmatprep.subr.mxu0 0.0
        %247 = vmatpush1.msra.mxu0 0.0
        %248 = vmatprep.subr.mxu0 0.0
        %249 = vmatpush1.msra.mxu0 0.0
        %250 = vmatprep.subr.mxu0 0.0
        %251 = vmatpush1.msra.mxu0 0.0
        %252 = vmatprep.subr.mxu0 0.0
        %253 = vmatpush1.msra.mxu0 0.0
        %254 = vmatprep.subr.mxu0 0.0
        %255 = vmatpush1.msra.mxu0 0.0
        %256 = vmatprep.subr.mxu0 0.0
        %257 = vmatpush1.msra.mxu0 0.0
        %258 = vmatprep.subr.mxu0 0.0
        %259 = vmatpush1.msra.mxu0 0.0
        %260 = vmatprep.subr.mxu0 0.0
        %261 = vmatpush1.msra.mxu0 0.0
        %262 = vmatprep.subr.mxu0 0.0
        %263 = vmatpush1.msra.mxu0 0.0
        %264 = vmatprep.subr.mxu0 0.0
        %265 = vmatpush1.msra.mxu0 0.0
        %266 = vmatprep.subr.mxu0 0.0
        %267 = vmatpush1.msra.mxu0 0.0
        %268 = vmatprep.subr.mxu0 0.0
        %269 = vmatpush1.msra.mxu0 0.0
        %270 = vmatprep.subr.mxu0 0.0
        %271 = vmatpush1.msra.mxu0 0.0
        %272 = vmatprep.subr.mxu0 0.0
        %273 = vmatpush1.msra.mxu0 0.0
        %274 = vmatprep.subr.mxu0 0.0
        %275 = vmatpush1.msra.mxu0 0.0
        %276 = vmatprep.subr.mxu0 0.0
        %277 = vmatpush1.msra.mxu0 0.0
        %278 = vmatprep.subr.mxu0 0.0
        %279 = vmatpush1.msra.mxu0 0.0
        %280 = vmatprep.subr.mxu0 0.0
        %281 = vmatpush1.msra.mxu0 0.0
        %282 = vmatprep.subr.mxu0 0.0
        %283 = vmatpush1.msra.mxu0 0.0
        %284 = vmatprep.subr.mxu0 0.0
        %285 = vmatpush1.msra.mxu0 0.0
        %286 = vmatprep.subr.mxu0 0.0
        %287 = vmatpush1.msra.mxu0 0.0
        %288 = vmatprep.subr.mxu0 0.0
        %289 = vmatpush1.msra.mxu0 0.0
        %290 = vmatprep.subr.mxu0 0.0
        %291 = vmatpush1.msra.mxu0 0.0
        %292 = vmatprep.subr.mxu0 0.0
        %293 = vmatpush1.msra.mxu0 0.0
        %294 = vmatprep.mubr.f32.mxu0 0.0
        %295 = vmatmul.mubr.f32.gmra.mrb[0].mxu0 %v225
        %v296 = vpop.f32.mrb[0].mxu0
        %v297 = vadd.f32 %v222, %v296
        %v298 = vpop.f32.mrb[0].mxu0
        %299 = vmatprep.mubr.f32.mxu0 0.0
        %300 = vmatmul.mubr.f32.gmra.mrb[0].mxu0 %v228
        %v301 = vpop.f32.mrb[0].mxu0
        %v302 = vadd.f32 %v222, %v301
        %v303 = vpop.f32.mrb[0].mxu0
        %304 = vdwg.mxu0
        %v305 = vmax.f32 %v297, 0.0
        %v306 = vmax.f32 %v302, 0.0
        %v307 = vld [vmem:[#allocation2] sm:$0xff]
        %v308 = vld [vmem:[#allocation2 + $0x8] sm:$0xff]
        %v309 = vld [vmem:[#allocation2 + $0x10] sm:$0xff]
        %v310 = vld [vmem:[#allocation2 + $0x18] sm:$0xff]
        %v311 = vld [vmem:[#allocation2 + $0x20] sm:$0xff]
        %v312 = vld [vmem:[#allocation2 + $0x28] sm:$0xff]
        %v313 = vld [vmem:[#allocation2 + $0x30] sm:$0xff]
        %v314 = vld [vmem:[#allocation2 + $0x38] sm:$0xff]
        %v315 = vld [vmem:[#allocation2 + $0x40] sm:$0xff]
        %v316 = vld [vmem:[#allocation2 + $0x48] sm:$0xff]
        %v317 = vld [vmem:[#allocation2 + $0x50] sm:$0xff]
        %v318 = vld [vmem:[#allocation2 + $0x58] sm:$0xff]
        %v319 = vld [vmem:[#allocation2 + $0x60] sm:$0xff]
        %v320 = vld [vmem:[#allocation2 + $0x68] sm:$0xff]
        %v321 = vld [vmem:[#allocation2 + $0x70] sm:$0xff]
        %v322 = vld [vmem:[#allocation2 + $0x78] sm:$0xff]
        %v323 = vlaneseq
        %v324 = vshrl.u32 %v323, 7
        %v325 = vsub.s32 1, %v324
        %v326 = vrot.slane %v216, %v325
        %327 = vmatprep.subr.mxu0 0.0
        %328 = vmatpush1.msra.mxu0 %v307
        %329 = vmatprep.subr.mxu0 0.0
        %330 = vmatpush1.msra.mxu0 %v308
        %331 = vmatprep.subr.mxu0 0.0
        %332 = vmatpush1.msra.mxu0 %v309
        %333 = vmatprep.subr.mxu0 0.0
        %334 = vmatpush1.msra.mxu0 %v310
        %335 = vmatprep.subr.mxu0 0.0
        %336 = vmatpush1.msra.mxu0 %v311
        %337 = vmatprep.subr.mxu0 0.0
        %338 = vmatpush1.msra.mxu0 %v312
        %339 = vmatprep.subr.mxu0 0.0
        %340 = vmatpush1.msra.mxu0 %v313
        %341 = vmatprep.subr.mxu0 0.0
        %342 = vmatpush1.msra.mxu0 %v314
        %343 = vmatprep.subr.mxu0 0.0
        %344 = vmatpush1.msra.mxu0 %v315
        %345 = vmatprep.subr.mxu0 0.0
        %346 = vmatpush1.msra.mxu0 %v316
        %347 = vmatprep.subr.mxu0 0.0
        %348 = vmatpush1.msra.mxu0 %v317
        %349 = vmatprep.subr.mxu0 0.0
        %350 = vmatpush1.msra.mxu0 %v318
        %351 = vmatprep.subr.mxu0 0.0
        %352 = vmatpush1.msra.mxu0 %v319
        %353 = vmatprep.subr.mxu0 0.0
        %354 = vmatpush1.msra.mxu0 %v320
        %355 = vmatprep.subr.mxu0 0.0
        %356 = vmatpush1.msra.mxu0 %v321
        %357 = vmatprep.subr.mxu0 0.0
        %358 = vmatpush1.msra.mxu0 %v322
        %359 = vmatprep.subr.mxu0 0.0
        %360 = vmatpush1.msra.mxu0 0.0
        %361 = vmatprep.subr.mxu0 0.0
        %362 = vmatpush1.msra.mxu0 0.0
        %363 = vmatprep.subr.mxu0 0.0
        %364 = vmatpush1.msra.mxu0 0.0
        %365 = vmatprep.subr.mxu0 0.0
        %366 = vmatpush1.msra.mxu0 0.0
        %367 = vmatprep.subr.mxu0 0.0
        %368 = vmatpush1.msra.mxu0 0.0
        %369 = vmatprep.subr.mxu0 0.0
        %370 = vmatpush1.msra.mxu0 0.0
        %371 = vmatprep.subr.mxu0 0.0
        %372 = vmatpush1.msra.mxu0 0.0
        %373 = vmatprep.subr.mxu0 0.0
        %374 = vmatpush1.msra.mxu0 0.0
        %375 = vmatprep.subr.mxu0 0.0
        %376 = vmatpush1.msra.mxu0 0.0
        %377 = vmatprep.subr.mxu0 0.0
        %378 = vmatpush1.msra.mxu0 0.0
        %379 = vmatprep.subr.mxu0 0.0
        %380 = vmatpush1.msra.mxu0 0.0
        %381 = vmatprep.subr.mxu0 0.0
        %382 = vmatpush1.msra.mxu0 0.0
        %383 = vmatprep.subr.mxu0 0.0
        %384 = vmatpush1.msra.mxu0 0.0
        %385 = vmatprep.subr.mxu0 0.0
        %386 = vmatpush1.msra.mxu0 0.0
        %387 = vmatprep.subr.mxu0 0.0
        %388 = vmatpush1.msra.mxu0 0.0
        %389 = vmatprep.subr.mxu0 0.0
        %390 = vmatpush1.msra.mxu0 0.0
        %391 = vmatprep.mubr.f32.mxu0 0.0
        %392 = vmatmul.mubr.f32.gmra.mrb[0].mxu0 %v305
        %v393 = vpop.f32.mrb[0].mxu0
        %v394 = vadd.f32 %v326, %v393
        %v395 = vpop.f32.mrb[0].mxu0
        %396 = vmatprep.mubr.f32.mxu0 0.0
        %397 = vmatmul.mubr.f32.gmra.mrb[0].mxu0 %v306
        %v398 = vpop.f32.mrb[0].mxu0
        %v399 = vadd.f32 %v326, %v398
        %v400 = vpop.f32.mrb[0].mxu0
        %401 = vdwg.mxu0
        %v402 = vmax.f32 %v394, 0.0
        %v403 = vmax.f32 %v399, 0.0
        %s404 = scalar_lea.vmem [#allocation2], 128
        %v405 = vld [vmem:[%s404] sm:$0xff]
        %v406 = vld [vmem:[%s404 + $0x8] sm:$0xff]
        %v407 = vld [vmem:[%s404 + $0x10] sm:$0xff]
        %v408 = vld [vmem:[%s404 + $0x18] sm:$0xff]
        %v409 = vld [vmem:[%s404 + $0x20] sm:$0xff]
        %v410 = vld [vmem:[%s404 + $0x28] sm:$0xff]
        %v411 = vld [vmem:[%s404 + $0x30] sm:$0xff]
        %v412 = vld [vmem:[%s404 + $0x38] sm:$0xff]
        %v413 = vld [vmem:[%s404 + $0x40] sm:$0xff]
        %v414 = vld [vmem:[%s404 + $0x48] sm:$0xff]
        %v415 = vld [vmem:[%s404 + $0x50] sm:$0xff]
        %v416 = vld [vmem:[%s404 + $0x58] sm:$0xff]
        %v417 = vld [vmem:[%s404 + $0x60] sm:$0xff]
        %v418 = vld [vmem:[%s404 + $0x68] sm:$0xff]
        %v419 = vld [vmem:[%s404 + $0x70] sm:$0xff]
        %v420 = vld [vmem:[%s404 + $0x78] sm:$0xff]
        %v421 = vlaneseq
        %v422 = vshrl.u32 %v421, 7
        %v423 = vsub.s32 2, %v422
        %v424 = vrot.slane %v216, %v423
        %425 = vmatprep.subr.mxu0 0.0
        %426 = vmatpush1.msra.mxu0 %v405
        %427 = vmatprep.subr.mxu0 0.0
        %428 = vmatpush1.msra.mxu0 %v406
        %429 = vmatprep.subr.mxu0 0.0
        %430 = vmatpush1.msra.mxu0 %v407
        %431 = vmatprep.subr.mxu0 0.0
        %432 = vmatpush1.msra.mxu0 %v408
        %433 = vmatprep.subr.mxu0 0.0
        %434 = vmatpush1.msra.mxu0 %v409
        %435 = vmatprep.subr.mxu0 0.0
        %436 = vmatpush1.msra.mxu0 %v410
        %437 = vmatprep.subr.mxu0 0.0
        %438 = vmatpush1.msra.mxu0 %v411
        %439 = vmatprep.subr.mxu0 0.0
        %440 = vmatpush1.msra.mxu0 %v412
        %441 = vmatprep.subr.mxu0 0.0
        %442 = vmatpush1.msra.mxu0 %v413
        %443 = vmatprep.subr.mxu0 0.0
        %444 = vmatpush1.msra.mxu0 %v414
        %445 = vmatprep.subr.mxu0 0.0
        %446 = vmatpush1.msra.mxu0 %v415
        %447 = vmatprep.subr.mxu0 0.0
        %448 = vmatpush1.msra.mxu0 %v416
        %449 = vmatprep.subr.mxu0 0.0
        %450 = vmatpush1.msra.mxu0 %v417
        %451 = vmatprep.subr.mxu0 0.0
        %452 = vmatpush1.msra.mxu0 %v418
        %453 = vmatprep.subr.mxu0 0.0
        %454 = vmatpush1.msra.mxu0 %v419
        %455 = vmatprep.subr.mxu0 0.0
        %456 = vmatpush1.msra.mxu0 %v420
        %457 = vmatprep.subr.mxu0 0.0
        %458 = vmatpush1.msra.mxu0 0.0
        %459 = vmatprep.subr.mxu0 0.0
        %460 = vmatpush1.msra.mxu0 0.0
        %461 = vmatprep.subr.mxu0 0.0
        %462 = vmatpush1.msra.mxu0 0.0
        %463 = vmatprep.subr.mxu0 0.0
        %464 = vmatpush1.msra.mxu0 0.0
        %465 = vmatprep.subr.mxu0 0.0
        %466 = vmatpush1.msra.mxu0 0.0
        %467 = vmatprep.subr.mxu0 0.0
        %468 = vmatpush1.msra.mxu0 0.0
        %469 = vmatprep.subr.mxu0 0.0
        %470 = vmatpush1.msra.mxu0 0.0
        %471 = vmatprep.subr.mxu0 0.0
        %472 = vmatpush1.msra.mxu0 0.0
        %473 = vmatprep.subr.mxu0 0.0
        %474 = vmatpush1.msra.mxu0 0.0
        %475 = vmatprep.subr.mxu0 0.0
        %476 = vmatpush1.msra.mxu0 0.0
        %477 = vmatprep.subr.mxu0 0.0
        %478 = vmatpush1.msra.mxu0 0.0
        %479 = vmatprep.subr.mxu0 0.0
        %480 = vmatpush1.msra.mxu0 0.0
        %481 = vmatprep.subr.mxu0 0.0
        %482 = vmatpush1.msra.mxu0 0.0
        %483 = vmatprep.subr.mxu0 0.0
        %484 = vmatpush1.msra.mxu0 0.0
        %485 = vmatprep.subr.mxu0 0.0
        %486 = vmatpush1.msra.mxu0 0.0
        %487 = vmatprep.subr.mxu0 0.0
        %488 = vmatpush1.msra.mxu0 0.0
        %489 = vmatprep.mubr.f32.mxu0 0.0
        %490 = vmatmul.mubr.f32.gmra.mrb[0].mxu0 %v402
        %v491 = vpop.f32.mrb[0].mxu0
        %v492 = vadd.f32 %v424, %v491
        %v493 = vpop.f32.mrb[0].mxu0
        %494 = vmatprep.mubr.f32.mxu0 0.0
        %495 = vmatmul.mubr.f32.gmra.mrb[0].mxu0 %v403
        %v496 = vpop.f32.mrb[0].mxu0
        %v497 = vadd.f32 %v424, %v496
        %v498 = vpop.f32.mrb[0].mxu0
        %499 = vdwg.mxu0
        %v500 = vmax.f32 %v492, 0.0
        %v501 = vmax.f32 %v497, 0.0
        %s502 = scalar_lea.vmem [#allocation2], 256
        %v503 = vld [vmem:[%s502] sm:$0xff]
        %v504 = vld [vmem:[%s502 + $0x8] sm:$0xff]
        %v505 = vld [vmem:[%s502 + $0x10] sm:$0xff]
        %v506 = vld [vmem:[%s502 + $0x18] sm:$0xff]
        %v507 = vld [vmem:[%s502 + $0x20] sm:$0xff]
        %v508 = vld [vmem:[%s502 + $0x28] sm:$0xff]
        %v509 = vld [vmem:[%s502 + $0x30] sm:$0xff]
        %v510 = vld [vmem:[%s502 + $0x38] sm:$0xff]
        %v511 = vld [vmem:[%s502 + $0x40] sm:$0xff]
        %v512 = vld [vmem:[%s502 + $0x48] sm:$0xff]
        %v513 = vld [vmem:[%s502 + $0x50] sm:$0xff]
        %v514 = vld [vmem:[%s502 + $0x58] sm:$0xff]
        %v515 = vld [vmem:[%s502 + $0x60] sm:$0xff]
        %v516 = vld [vmem:[%s502 + $0x68] sm:$0xff]
        %v517 = vld [vmem:[%s502 + $0x70] sm:$0xff]
        %v518 = vld [vmem:[%s502 + $0x78] sm:$0xff]
        %v519 = vlaneseq
        %v520 = vshrl.u32 %v519, 7
        %v521 = vsub.s32 3, %v520
        %v522 = vrot.slane %v216, %v521
        %523 = vmatprep.subr.mxu0 0.0
        %524 = vmatpush1.msra.mxu0 %v503
        %525 = vmatprep.subr.mxu0 0.0
        %526 = vmatpush1.msra.mxu0 %v504
        %527 = vmatprep.subr.mxu0 0.0
        %528 = vmatpush1.msra.mxu0 %v505
        %529 = vmatprep.subr.mxu0 0.0
        %530 = vmatpush1.msra.mxu0 %v506
        %531 = vmatprep.subr.mxu0 0.0
        %532 = vmatpush1.msra.mxu0 %v507
        %533 = vmatprep.subr.mxu0 0.0
        %534 = vmatpush1.msra.mxu0 %v508
        %535 = vmatprep.subr.mxu0 0.0
        %536 = vmatpush1.msra.mxu0 %v509
        %537 = vmatprep.subr.mxu0 0.0
        %538 = vmatpush1.msra.mxu0 %v510
        %539 = vmatprep.subr.mxu0 0.0
        %540 = vmatpush1.msra.mxu0 %v511
        %541 = vmatprep.subr.mxu0 0.0
        %542 = vmatpush1.msra.mxu0 %v512
        %543 = vmatprep.subr.mxu0 0.0
        %544 = vmatpush1.msra.mxu0 %v513
        %545 = vmatprep.subr.mxu0 0.0
        %546 = vmatpush1.msra.mxu0 %v514
        %547 = vmatprep.subr.mxu0 0.0
        %548 = vmatpush1.msra.mxu0 %v515
        %549 = vmatprep.subr.mxu0 0.0
        %550 = vmatpush1.msra.mxu0 %v516
        %551 = vmatprep.subr.mxu0 0.0
        %552 = vmatpush1.msra.mxu0 %v517
        %553 = vmatprep.subr.mxu0 0.0
        %554 = vmatpush1.msra.mxu0 %v518
        %555 = vmatprep.subr.mxu0 0.0
        %556 = vmatpush1.msra.mxu0 0.0
        %557 = vmatprep.subr.mxu0 0.0
        %558 = vmatpush1.msra.mxu0 0.0
        %559 = vmatprep.subr.mxu0 0.0
        %560 = vmatpush1.msra.mxu0 0.0
        %561 = vmatprep.subr.mxu0 0.0
        %562 = vmatpush1.msra.mxu0 0.0
        %563 = vmatprep.subr.mxu0 0.0
        %564 = vmatpush1.msra.mxu0 0.0
        %565 = vmatprep.subr.mxu0 0.0
        %566 = vmatpush1.msra.mxu0 0.0
        %567 = vmatprep.subr.mxu0 0.0
        %568 = vmatpush1.msra.mxu0 0.0
        %569 = vmatprep.subr.mxu0 0.0
        %570 = vmatpush1.msra.mxu0 0.0
        %571 = vmatprep.subr.mxu0 0.0
        %572 = vmatpush1.msra.mxu0 0.0
        %573 = vmatprep.subr.mxu0 0.0
        %574 = vmatpush1.msra.mxu0 0.0
        %575 = vmatprep.subr.mxu0 0.0
        %576 = vmatpush1.msra.mxu0 0.0
        %577 = vmatprep.subr.mxu0 0.0
        %578 = vmatpush1.msra.mxu0 0.0
        %579 = vmatprep.subr.mxu0 0.0
        %580 = vmatpush1.msra.mxu0 0.0
        %581 = vmatprep.subr.mxu0 0.0
        %582 = vmatpush1.msra.mxu0 0.0
        %583 = vmatprep.subr.mxu0 0.0
        %584 = vmatpush1.msra.mxu0 0.0
        %585 = vmatprep.subr.mxu0 0.0
        %586 = vmatpush1.msra.mxu0 0.0
        %587 = vmatprep.mubr.f32.mxu0 0.0
        %588 = vmatmul.mubr.f32.gmra.mrb[0].mxu0 %v500
        %v589 = vpop.f32.mrb[0].mxu0
        %v590 = vadd.f32 %v522, %v589
        %v591 = vpop.f32.mrb[0].mxu0
        %592 = vmatprep.mubr.f32.mxu0 0.0
        %593 = vmatmul.mubr.f32.gmra.mrb[0].mxu0 %v501
        %v594 = vpop.f32.mrb[0].mxu0
        %v595 = vadd.f32 %v522, %v594
        %v596 = vpop.f32.mrb[0].mxu0
        %597 = vdwg.mxu0
        %598 = vst [vmem:[%s206] sm:$0xff] %v590
        %599 = vst [vmem:[%s206 + $0x8] sm:$0xff] %v595
        %s600 = sand.u32 %s116, 1
        %s601 = scalar_lea.sflag [#allocation4], %s600
        %s602 = sand.u32 %s116, 1
        %s603 = smul.addr %s602, 16
        %s604 = scalar_lea.vmem [#allocation5], %s603
        // Predicated region
        $region41: #{tpu_custom_call.1} parent=35 // pred_check
          %p605 = pneg %p126
        $region42: #{tpu_custom_call.1} parent=35 // pred_check_branch
          %607 = sbr.rel (%p605) target = $region44
        $region43: #{tpu_custom_call.1} parent=35 // pred_region
          %s608 = smul.u32 2, %s19
          %s610 = ssub.s32 256, 256
          %611 = vsyncadd %s601, %s610
          %s612 = smul.addr %s608, 128
          %s613 = scalar_lea.hbm %s4, %s612
          %s614 = sshll.u32 %s604, 4
          %s615 = int_to_ptr.vmem [resolvable:$true] %s614
          %620 = dma.vmem_to_hbm [thread:$0]  %s615, 256, %s613, %s601, 128, 128, 8
        $region44: #{tpu_custom_call.1} parent=35 // pred_fallthru
          _
      $region36: #{tpu_custom_call.1} parent=5 // pred_fallthru
        _
      %p621 = scmp.le.s32.totalorder 2, %s14
      // Predicated region
      $region45: #{tpu_custom_call.1} parent=5 // pred_check
        %p622 = pneg %p621
      $region46: #{tpu_custom_call.1} parent=5 // pred_check_branch
        %624 = sbr.rel (%p622) target = $region48
      $region47: #{tpu_custom_call.1} parent=5 // pred_region
        %s625 = ssub.s32 %s14, 2
        // Predicated region
        $region49: #{tpu_custom_call.1} parent=47 // pred_check
          %p626 = pneg %p132
        $region50: #{tpu_custom_call.1} parent=47 // pred_check_branch
          %628 = sbr.rel (%p626) target = $region52
        $region51: #{tpu_custom_call.1} parent=47 // pred_region
          %s629 = sand.u32 %s117, 1
          %s630 = scalar_lea.sflag [#allocation4], %s629
          %s631 = sand.u32 %s117, 1
          %s632 = smul.addr %s631, 16
          %s633 = scalar_lea.vmem [#allocation5], %s632
          %634 = dma.done %s630, 256
        $region52: #{tpu_custom_call.1} parent=47 // pred_fallthru
          _
      $region48: #{tpu_custom_call.1} parent=5 // pred_fallthru
        _
    $region6: #{tpu_custom_call.1} parent=1 // loop_footer
      %s18 = sadd.s32 1, %s14
    $region7: #{tpu_custom_call.1} parent=1 // loop_footer_branch
      %13 = sbr.rel target = $region3
    $region8: #{tpu_custom_call.1} parent=1 // loop_exit
      _
    %635 = vsyncpa [#allocation3], 1
    %s636 = scalar_lea.sflag [#allocation3], 1
    %637 = vsyncpa %s636, 1
    %638 = vsyncpa [#allocation4], 1
    %s639 = scalar_lea.sflag [#allocation4], 1
    %640 = vsyncpa %s639, 1

</llo_original>
